<compile_context>
chip_gen: v5e
topology: v5e:2x2
jax: 0.10.0
libtpu: 0.0.40
codegen_flags: <defaults>
</compile_context>

<pallas_src>
import jax
import jax.numpy as jnp
from jax import lax
from jax.experimental import pallas as pl
from jax.experimental.pallas import tpu as pltpu

_LANE = 128     # lane width: pad state_dim up to a multiple of this
_SUBLANE = 8    # f32 sublane count: pad batch N up to a multiple of this


def _round_up(x: int, m: int) -> int:
    return (x + m - 1) // m * m


def _filter_seq_kernel(obs_ref, ctrl_ref, mean0_ref, a_ref, c_ref, b_ref,
                       out_ref, drive_ref):
    """Whole-sequence filter forward pass in a single kernel invocation.

    Shapes (already padded by the wrapper):
      obs_ref:   (T*Np, obs_dim)   f32
      ctrl_ref:  (T*Np, ctrl_dim)  f32
      mean0_ref: (Np, Sp)          f32   prior belief mean
      a_ref:     (Sp, Sp)          bf16  state transition
      c_ref:     (obs_dim, Sp)     bf16  observation -> state
      b_ref:     (ctrl_dim, Sp)    bf16  control -> state
      out_ref:   (T*Np, Sp)        f32   stacked state predictions
      drive_ref: (T*Np, Sp)        f32   VMEM scratch (hoisted drive terms)
    """
    tn, _ = out_ref.shape
    np_ = mean0_ref.shape[0]
    n_steps = tn // np_

    # ---- Phase 1 (parallel over time): belief-independent drive terms -------
    # One batched GEMM over all T*Np rows instead of T tiny per-step matmuls.
    drive_ref[...] = (
        jnp.dot(obs_ref[...].astype(jnp.bfloat16), c_ref[...],
                preferred_element_type=jnp.float32)
        + jnp.dot(ctrl_ref[...].astype(jnp.bfloat16), b_ref[...],
                  preferred_element_type=jnp.float32)
    )

    a = a_ref[...]  # hoisted bf16 weight load, reused every step

    # ---- Phase 2 (serial): the actual belief recursion ----------------------
    def step(t, belief):
        row = pl.multiple_of(t * np_, np_)   # 8-aligned sublane offset
        new_belief = jnp.tanh(
            jnp.dot(belief.astype(jnp.bfloat16), a,
                    preferred_element_type=jnp.float32)
            + drive_ref[pl.ds(row, np_), :]
        )
        out_ref[pl.ds(row, np_), :] = new_belief   # lane-dense (Np, 128) store
        return new_belief

    lax.fori_loop(0, n_steps, step, mean0_ref[...],
                  unroll=True if n_steps <= 16 else 8)


class PallasFilter:
    """JAX/Pallas analogue of torchfilter.base.Filter with a linear-tanh step."""

    def __init__(self, *, state_dim: int, obs_dim: int, ctrl_dim: int):
        self.state_dim = state_dim
        self.obs_dim = obs_dim
        self.ctrl_dim = ctrl_dim
        self._sp = _round_up(state_dim, _LANE)   # lane-dense padded state dim

        # Deterministic synthetic parameters (instantiation of the abstract step).
        k = jax.random.PRNGKey(0)
        ka, kb, kc = jax.random.split(k, 3)
        s = 1.0 / jnp.sqrt(jnp.float32(state_dim))
        self.A = jax.random.normal(ka, (state_dim, state_dim), jnp.float32) * s
        self.B = jax.random.normal(kb, (ctrl_dim, state_dim), jnp.float32) * s
        self.C = jax.random.normal(kc, (obs_dim, state_dim), jnp.float32) * s

        # Pre-padded bf16 MXU operands (accumulation stays f32 in-kernel).
        sd, sp = state_dim, self._sp
        self._A_pad = (jnp.zeros((sp, sp), jnp.float32)
                       .at[:sd, :sd].set(self.A).astype(jnp.bfloat16))
        self._B_pad = (jnp.zeros((ctrl_dim, sp), jnp.float32)
                       .at[:, :sd].set(self.B).astype(jnp.bfloat16))
        self._C_pad = (jnp.zeros((obs_dim, sp), jnp.float32)
                       .at[:, :sd].set(self.C).astype(jnp.bfloat16))

        self._belief_mean = None
        self._belief_cov = None

    def initialize_beliefs(self, *, mean, covariance):
        assert mean.shape[-1] == self.state_dim
        assert covariance.shape[-2:] == (self.state_dim, self.state_dim)
        self._belief_mean = jnp.asarray(mean, jnp.float32)
        # TODO(synk): covariance is stored but not propagated by this simple
        # linear-step instantiation of the abstract filter.
        self._belief_cov = jnp.asarray(covariance, jnp.float32)

    def forward_loop(self, *, observations, controls):
        """(T, N, obs_dim), (T, N, ctrl_dim) -> (T, N, state_dim)."""
        T, N = controls.shape[:2]
        assert observations.shape[:2] == (T, N)
        assert (self._belief_mean is not None
                and self._belief_mean.shape == (N, self.state_dim))

        sd, sp, od, cd = self.state_dim, self._sp, self.obs_dim, self.ctrl_dim
        np_ = _round_up(N, _SUBLANE)   # pad batch to a full sublane tile

        # Cheap XLA-side layout plumbing: pad to (8, 128)-friendly shapes and
        # flatten time into the row dim so the kernel sees lane-dense 2-D slabs.
        obs2d = jnp.pad(observations.astype(jnp.float32),
                        ((0, 0), (0, np_ - N), (0, 0))).reshape(T * np_, od)
        ctrl2d = jnp.pad(controls.astype(jnp.float32),
                         ((0, 0), (0, np_ - N), (0, 0))).reshape(T * np_, cd)
        mean_p = jnp.pad(self._belief_mean, ((0, np_ - N), (0, sp - sd)))

        out2d = pl.pallas_call(
            _filter_seq_kernel,
            out_shape=jax.ShapeDtypeStruct((T * np_, sp), jnp.float32),
            in_specs=[pl.BlockSpec(memory_space=pltpu.MemorySpace.VMEM)] * 6,
            out_specs=pl.BlockSpec(memory_space=pltpu.MemorySpace.VMEM),
            scratch_shapes=[pltpu.VMEM((T * np_, sp), jnp.float32)],
        )(obs2d, ctrl2d, mean_p, self._A_pad, self._C_pad, self._B_pad)

        # TODO(synk): for large N on multi-TensorCore parts (v7x), add a leading
        # "parallel" grid axis over batch tiles; at N=2 both cores cannot be fed.
        return out2d.reshape(T, np_, sp)[:, :N, :sd]

    def forward(self, *, observations, controls):
        """(N, obs_dim), (N, ctrl_dim) -> (N, state_dim); bootstraps forward_loop."""
        output = self.forward_loop(
            observations=observations[None, ...], controls=controls[None, ...]
        )
        assert output.shape[0] == 1
        return output[0]


def _reference_forward_loop(observations, controls, mean0, a_bf, b_bf, c_bf):
    """Pure-JAX reference using the same bf16 operands / f32 accumulation."""
    def step(belief, oc):
        o, c = oc
        pre = (jnp.dot(belief.astype(jnp.bfloat16), a_bf,
                       preferred_element_type=jnp.float32)
               + (jnp.dot(o.astype(jnp.bfloat16), c_bf,
                          preferred_element_type=jnp.float32)
                  + jnp.dot(c.astype(jnp.bfloat16), b_bf,
                            preferred_element_type=jnp.float32)))
        nb = jnp.tanh(pre)
        return nb, nb

    _, ys = lax.scan(step, mean0, (observations, controls))
    return ys


if __name__ == "__main__":
    T, N = 8, 2
    state_dim, obs_dim, ctrl_dim = 32, 16, 8

    key = jax.random.PRNGKey(0)
    k_obs, k_ctrl, k_mean = jax.random.split(key, 3)
    observations = jax.random.normal(k_obs, (T, N, obs_dim), jnp.float32)
    controls = jax.random.normal(k_ctrl, (T, N, ctrl_dim), jnp.float32)
    mean0 = jax.random.normal(k_mean, (N, state_dim), jnp.float32) * 0.1
    cov0 = jnp.tile(jnp.eye(state_dim, dtype=jnp.float32)[None], (N, 1, 1))

    filt = PallasFilter(state_dim=state_dim, obs_dim=obs_dim, ctrl_dim=ctrl_dim)
    filt.initialize_beliefs(mean=mean0, covariance=cov0)

    # Full-sequence forward pass (T, N, state_dim).
    states = filt.forward_loop(observations=observations, controls=controls)
    states = jax.block_until_ready(states)
    assert states.shape == (T, N, state_dim)

    # Single-timestep forward pass (N, state_dim), bootstrapped via forward_loop.
    single = filt.forward(observations=observations[0], controls=controls[0])
    single = jax.block_until_ready(single)
    assert single.shape == (N, state_dim)

    # Cross-check against a pure-JAX reference built from the same bf16 weights.
    a_bf = filt._A_pad[:state_dim, :state_dim]
    b_bf = filt._B_pad[:, :state_dim]
    c_bf = filt._C_pad[:, :state_dim]
    ref = _reference_forward_loop(observations, controls, mean0, a_bf, b_bf, c_bf)
    err_seq = float(jnp.max(jnp.abs(states - ref)))
    err_one = float(jnp.max(jnp.abs(single - ref[0])))
    assert err_seq < 1e-2, f"sequence mismatch, max abs err {err_seq}"
    assert err_one < 1e-2, f"single-step mismatch, max abs err {err_one}"

    print("KERNEL_OK")
</pallas_src>

<mosaic_0001>
module attributes {stable_mosaic.version = 11 : i64} {
  func.func @_filter_seq_kernel(%arg0: memref<64x16xf32, #tpu.memory_space<vmem>>, %arg1: memref<64x8xf32, #tpu.memory_space<vmem>>, %arg2: memref<8x128xf32, #tpu.memory_space<vmem>>, %arg3: memref<128x128xbf16, #tpu.memory_space<vmem>>, %arg4: memref<16x128xbf16, #tpu.memory_space<vmem>>, %arg5: memref<8x128xbf16, #tpu.memory_space<vmem>>, %arg6: memref<64x128xf32, #tpu.memory_space<vmem>>, %arg7: memref<64x128xf32, #tpu.memory_space<vmem>>) attributes {dimension_semantics = [], scalar_prefetch = 0 : i64, scratch_operands = 1 : i64, tpu.core_type = #tpu.core_type<tc>} {
    %c0 = arith.constant 0 : index
    %c0_0 = arith.constant 0 : index
    %0 = vector.load %arg0[%c0, %c0_0] : memref<64x16xf32, #tpu.memory_space<vmem>>, vector<64x16xf32>
    %1 = arith.truncf %0 : vector<64x16xf32> to vector<64x16xbf16>
    %c0_1 = arith.constant 0 : index
    %c0_2 = arith.constant 0 : index
    %2 = vector.load %arg4[%c0_1, %c0_2] : memref<16x128xbf16, #tpu.memory_space<vmem>>, vector<16x128xbf16>
    %cst = arith.constant dense<0.000000e+00> : vector<64x128xf32>
    %3 = tpu.matmul %1, %2, %cst {dimension_numbers = #tpu.dot_dimension_numbers<[1], [0], [0], [1], [0, 0, 1, 1], [], []>} : vector<64x16xbf16>, vector<16x128xbf16>, vector<64x128xf32> -> vector<64x128xf32>
    %c0_3 = arith.constant 0 : index
    %c0_4 = arith.constant 0 : index
    %4 = vector.load %arg1[%c0_3, %c0_4] : memref<64x8xf32, #tpu.memory_space<vmem>>, vector<64x8xf32>
    %5 = arith.truncf %4 : vector<64x8xf32> to vector<64x8xbf16>
    %c0_5 = arith.constant 0 : index
    %c0_6 = arith.constant 0 : index
    %6 = vector.load %arg5[%c0_5, %c0_6] : memref<8x128xbf16, #tpu.memory_space<vmem>>, vector<8x128xbf16>
    %cst_7 = arith.constant dense<0.000000e+00> : vector<64x128xf32>
    %7 = tpu.matmul %5, %6, %cst_7 {dimension_numbers = #tpu.dot_dimension_numbers<[1], [0], [0], [1], [0, 0, 1, 1], [], []>} : vector<64x8xbf16>, vector<8x128xbf16>, vector<64x128xf32> -> vector<64x128xf32>
    %8 = arith.addf %3, %7 : vector<64x128xf32>
    %c0_8 = arith.constant 0 : index
    %c0_9 = arith.constant 0 : index
    %9 = vector.load %arg7[%c0_8, %c0_9] : memref<64x128xf32, #tpu.memory_space<vmem>>, vector<64x128xf32>
    tpu.vector_store %arg7[%c0_8, %c0_9], %8 {strides = array<i32>} : memref<64x128xf32, #tpu.memory_space<vmem>>, vector<64x128xf32>,
    %c0_10 = arith.constant 0 : index
    %c0_11 = arith.constant 0 : index
    %10 = vector.load %arg3[%c0_10, %c0_11] : memref<128x128xbf16, #tpu.memory_space<vmem>>, vector<128x128xbf16>
    %c0_12 = arith.constant 0 : index
    %c0_13 = arith.constant 0 : index
    %11 = vector.load %arg2[%c0_12, %c0_13] : memref<8x128xf32, #tpu.memory_space<vmem>>, vector<8x128xf32>
    %c0_i32 = arith.constant 0 : i32
    %c8_i32 = arith.constant 8 : i32
    %12 = arith.muli %c0_i32, %c8_i32 : i32
    %13 = tpu.assume_multiple %12, 8 : i32
    %14 = arith.truncf %11 : vector<8x128xf32> to vector<8x128xbf16>
    %cst_14 = arith.constant dense<0.000000e+00> : vector<8x128xf32>
    %15 = tpu.matmul %14, %10, %cst_14 {dimension_numbers = #tpu.dot_dimension_numbers<[1], [0], [0], [1], [0, 0, 1, 1], [], []>} : vector<8x128xbf16>, vector<128x128xbf16>, vector<8x128xf32> -> vector<8x128xf32>
    %16 = arith.index_cast %13 : i32 to index
    %c0_15 = arith.constant 0 : index
    %17 = vector.load %arg7[%16, %c0_15] : memref<64x128xf32, #tpu.memory_space<vmem>>, vector<8x128xf32>
    %18 = arith.addf %15, %17 : vector<8x128xf32>
    %19 = math.tanh %18 : vector<8x128xf32>
    %20 = arith.index_cast %13 : i32 to index
    %c0_16 = arith.constant 0 : index
    %21 = vector.load %arg6[%20, %c0_16] : memref<64x128xf32, #tpu.memory_space<vmem>>, vector<8x128xf32>
    tpu.vector_store %arg6[%20, %c0_16], %19 {strides = array<i32>} : memref<64x128xf32, #tpu.memory_space<vmem>>, vector<8x128xf32>,
    %c1_i32 = arith.constant 1 : i32
    %c8_i32_17 = arith.constant 8 : i32
    %22 = arith.muli %c1_i32, %c8_i32_17 : i32
    %23 = tpu.assume_multiple %22, 8 : i32
    %24 = arith.truncf %19 : vector<8x128xf32> to vector<8x128xbf16>
    %cst_18 = arith.constant dense<0.000000e+00> : vector<8x128xf32>
    %25 = tpu.matmul %24, %10, %cst_18 {dimension_numbers = #tpu.dot_dimension_numbers<[1], [0], [0], [1], [0, 0, 1, 1], [], []>} : vector<8x128xbf16>, vector<128x128xbf16>, vector<8x128xf32> -> vector<8x128xf32>
    %26 = arith.index_cast %23 : i32 to index
    %c0_19 = arith.constant 0 : index
    %27 = vector.load %arg7[%26, %c0_19] : memref<64x128xf32, #tpu.memory_space<vmem>>, vector<8x128xf32>
    %28 = arith.addf %25, %27 : vector<8x128xf32>
    %29 = math.tanh %28 : vector<8x128xf32>
    %30 = arith.index_cast %23 : i32 to index
    %c0_20 = arith.constant 0 : index
    %31 = vector.load %arg6[%30, %c0_20] : memref<64x128xf32, #tpu.memory_space<vmem>>, vector<8x128xf32>
    tpu.vector_store %arg6[%30, %c0_20], %29 {strides = array<i32>} : memref<64x128xf32, #tpu.memory_space<vmem>>, vector<8x128xf32>,
    %c2_i32 = arith.constant 2 : i32
    %c8_i32_21 = arith.constant 8 : i32
    %32 = arith.muli %c2_i32, %c8_i32_21 : i32
    %33 = tpu.assume_multiple %32, 8 : i32
    %34 = arith.truncf %29 : vector<8x128xf32> to vector<8x128xbf16>
    %cst_22 = arith.constant dense<0.000000e+00> : vector<8x128xf32>
    %35 = tpu.matmul %34, %10, %cst_22 {dimension_numbers = #tpu.dot_dimension_numbers<[1], [0], [0], [1], [0, 0, 1, 1], [], []>} : vector<8x128xbf16>, vector<128x128xbf16>, vector<8x128xf32> -> vector<8x128xf32>
    %36 = arith.index_cast %33 : i32 to index
    %c0_23 = arith.constant 0 : index
    %37 = vector.load %arg7[%36, %c0_23] : memref<64x128xf32, #tpu.memory_space<vmem>>, vector<8x128xf32>
    %38 = arith.addf %35, %37 : vector<8x128xf32>
    %39 = math.tanh %38 : vector<8x128xf32>
    %40 = arith.index_cast %33 : i32 to index
    %c0_24 = arith.constant 0 : index
    %41 = vector.load %arg6[%40, %c0_24] : memref<64x128xf32, #tpu.memory_space<vmem>>, vector<8x128xf32>
    tpu.vector_store %arg6[%40, %c0_24], %39 {strides = array<i32>} : memref<64x128xf32, #tpu.memory_space<vmem>>, vector<8x128xf32>,
    %c3_i32 = arith.constant 3 : i32
    %c8_i32_25 = arith.constant 8 : i32
    %42 = arith.muli %c3_i32, %c8_i32_25 : i32
    %43 = tpu.assume_multiple %42, 8 : i32
    %44 = arith.truncf %39 : vector<8x128xf32> to vector<8x128xbf16>
    %cst_26 = arith.constant dense<0.000000e+00> : vector<8x128xf32>
    %45 = tpu.matmul %44, %10, %cst_26 {dimension_numbers = #tpu.dot_dimension_numbers<[1], [0], [0], [1], [0, 0, 1, 1], [], []>} : vector<8x128xbf16>, vector<128x128xbf16>, vector<8x128xf32> -> vector<8x128xf32>
    %46 = arith.index_cast %43 : i32 to index
    %c0_27 = arith.constant 0 : index
    %47 = vector.load %arg7[%46, %c0_27] : memref<64x128xf32, #tpu.memory_space<vmem>>, vector<8x128xf32>
    %48 = arith.addf %45, %47 : vector<8x128xf32>
    %49 = math.tanh %48 : vector<8x128xf32>
    %50 = arith.index_cast %43 : i32 to index
    %c0_28 = arith.constant 0 : index
    %51 = vector.load %arg6[%50, %c0_28] : memref<64x128xf32, #tpu.memory_space<vmem>>, vector<8x128xf32>
    tpu.vector_store %arg6[%50, %c0_28], %49 {strides = array<i32>} : memref<64x128xf32, #tpu.memory_space<vmem>>, vector<8x128xf32>,
    %c4_i32 = arith.constant 4 : i32
    %c8_i32_29 = arith.constant 8 : i32
    %52 = arith.muli %c4_i32, %c8_i32_29 : i32
    %53 = tpu.assume_multiple %52, 8 : i32
    %54 = arith.truncf %49 : vector<8x128xf32> to vector<8x128xbf16>
    %cst_30 = arith.constant dense<0.000000e+00> : vector<8x128xf32>
    %55 = tpu.matmul %54, %10, %cst_30 {dimension_numbers = #tpu.dot_dimension_numbers<[1], [0], [0], [1], [0, 0, 1, 1], [], []>} : vector<8x128xbf16>, vector<128x128xbf16>, vector<8x128xf32> -> vector<8x128xf32>
    %56 = arith.index_cast %53 : i32 to index
    %c0_31 = arith.constant 0 : index
    %57 = vector.load %arg7[%56, %c0_31] : memref<64x128xf32, #tpu.memory_space<vmem>>, vector<8x128xf32>
    %58 = arith.addf %55, %57 : vector<8x128xf32>
    %59 = math.tanh %58 : vector<8x128xf32>
    %60 = arith.index_cast %53 : i32 to index
    %c0_32 = arith.constant 0 : index
    %61 = vector.load %arg6[%60, %c0_32] : memref<64x128xf32, #tpu.memory_space<vmem>>, vector<8x128xf32>
    tpu.vector_store %arg6[%60, %c0_32], %59 {strides = array<i32>} : memref<64x128xf32, #tpu.memory_space<vmem>>, vector<8x128xf32>,
    %c5_i32 = arith.constant 5 : i32
    %c8_i32_33 = arith.constant 8 : i32
    %62 = arith.muli %c5_i32, %c8_i32_33 : i32
    %63 = tpu.assume_multiple %62, 8 : i32
    %64 = arith.truncf %59 : vector<8x128xf32> to vector<8x128xbf16>
    %cst_34 = arith.constant dense<0.000000e+00> : vector<8x128xf32>
    %65 = tpu.matmul %64, %10, %cst_34 {dimension_numbers = #tpu.dot_dimension_numbers<[1], [0], [0], [1], [0, 0, 1, 1], [], []>} : vector<8x128xbf16>, vector<128x128xbf16>, vector<8x128xf32> -> vector<8x128xf32>
    %66 = arith.index_cast %63 : i32 to index
    %c0_35 = arith.constant 0 : index
    %67 = vector.load %arg7[%66, %c0_35] : memref<64x128xf32, #tpu.memory_space<vmem>>, vector<8x128xf32>
    %68 = arith.addf %65, %67 : vector<8x128xf32>
    %69 = math.tanh %68 : vector<8x128xf32>
    %70 = arith.index_cast %63 : i32 to index
    %c0_36 = arith.constant 0 : index
    %71 = vector.load %arg6[%70, %c0_36] : memref<64x128xf32, #tpu.memory_space<vmem>>, vector<8x128xf32>
    tpu.vector_store %arg6[%70, %c0_36], %69 {strides = array<i32>} : memref<64x128xf32, #tpu.memory_space<vmem>>, vector<8x128xf32>,
    %c6_i32 = arith.constant 6 : i32
    %c8_i32_37 = arith.constant 8 : i32
    %72 = arith.muli %c6_i32, %c8_i32_37 : i32
    %73 = tpu.assume_multiple %72, 8 : i32
    %74 = arith.truncf %69 : vector<8x128xf32> to vector<8x128xbf16>
    %cst_38 = arith.constant dense<0.000000e+00> : vector<8x128xf32>
    %75 = tpu.matmul %74, %10, %cst_38 {dimension_numbers = #tpu.dot_dimension_numbers<[1], [0], [0], [1], [0, 0, 1, 1], [], []>} : vector<8x128xbf16>, vector<128x128xbf16>, vector<8x128xf32> -> vector<8x128xf32>
    %76 = arith.index_cast %73 : i32 to index
    %c0_39 = arith.constant 0 : index
    %77 = vector.load %arg7[%76, %c0_39] : memref<64x128xf32, #tpu.memory_space<vmem>>, vector<8x128xf32>
    %78 = arith.addf %75, %77 : vector<8x128xf32>
    %79 = math.tanh %78 : vector<8x128xf32>
    %80 = arith.index_cast %73 : i32 to index
    %c0_40 = arith.constant 0 : index
    %81 = vector.load %arg6[%80, %c0_40] : memref<64x128xf32, #tpu.memory_space<vmem>>, vector<8x128xf32>
    tpu.vector_store %arg6[%80, %c0_40], %79 {strides = array<i32>} : memref<64x128xf32, #tpu.memory_space<vmem>>, vector<8x128xf32>,
    %c7_i32 = arith.constant 7 : i32
    %c8_i32_41 = arith.constant 8 : i32
    %82 = arith.muli %c7_i32, %c8_i32_41 : i32
    %83 = tpu.assume_multiple %82, 8 : i32
    %84 = arith.truncf %79 : vector<8x128xf32> to vector<8x128xbf16>
    %cst_42 = arith.constant dense<0.000000e+00> : vector<8x128xf32>
    %85 = tpu.matmul %84, %10, %cst_42 {dimension_numbers = #tpu.dot_dimension_numbers<[1], [0], [0], [1], [0, 0, 1, 1], [], []>} : vector<8x128xbf16>, vector<128x128xbf16>, vector<8x128xf32> -> vector<8x128xf32>
    %86 = arith.index_cast %83 : i32 to index
    %c0_43 = arith.constant 0 : index
    %87 = vector.load %arg7[%86, %c0_43] : memref<64x128xf32, #tpu.memory_space<vmem>>, vector<8x128xf32>
    %88 = arith.addf %85, %87 : vector<8x128xf32>
    %89 = math.tanh %88 : vector<8x128xf32>
    %90 = arith.index_cast %83 : i32 to index
    %c0_44 = arith.constant 0 : index
    %91 = vector.load %arg6[%90, %c0_44] : memref<64x128xf32, #tpu.memory_space<vmem>>, vector<8x128xf32>
    tpu.vector_store %arg6[%90, %c0_44], %89 {strides = array<i32>} : memref<64x128xf32, #tpu.memory_space<vmem>>, vector<8x128xf32>,
    %c8_i32_45 = arith.constant 8 : i32
    return
  }
}

</mosaic_0001>

<llo_original>
// kernel: tpu_custom_call.1
$region0: #{tpu_custom_call.1}
  #allocation0 [shape = 'u32[]', space=smem, size = 0x4, offset = 0x4, fixed_abs, tag = 'smem constant byte address 0x4 - core index']
  #allocation1 [shape = 'u32[72,128]{1,0:T(1,128)}', space=vmem, size = 0x9000, scoped, tag = 'internal scratch']
  #allocation2 [shape = 'f32[64,128]{1,0:T(8,128)}', space=vmem, size = 0x8000, scoped, tag = 'scratch operand']
  %s0 = inlined_call_operand.vmem [shape: f32[64,16], index: 0, kind: input, shape index: {}]
  %s1 = inlined_call_operand.vmem [shape: f32[64,8], index: 1, kind: input, shape index: {}]
  %s2 = inlined_call_operand.vmem [shape: f32[8,128], index: 2, kind: input, shape index: {}]
  %s3 = inlined_call_operand.vmem [shape: bf16[128,128], index: 3, kind: input, shape index: {}]
  %s4 = inlined_call_operand.vmem [shape: bf16[16,128], index: 4, kind: input, shape index: {}]
  %s5 = inlined_call_operand.vmem [shape: bf16[8,128], index: 5, kind: input, shape index: {}]
  %s6 = inlined_call_operand.hbm [shape: f32[64,128], index: 6, kind: output, shape index: {}]
  %s7 = sld [smem:[#allocation0]]
  $region34: #{tpu_custom_call.1} parent=0
    _
  %s9 = ssub.s32 1, %s7
  %s10 = scalar_select 0, %s9, %s7
  $region1: #{tpu_custom_call.1} parent=0
    #allocation3 [shape = 'u8[32768]{0}', space=vmem, size = 0x8000, scoped, tag = 'output window, operand 0, single buffered']
    #allocation4 [shape = 's32[1]{0}', space=sflag, size = 0x4, scoped, tag = 'scoped memory for tpu_custom_call.1']
    %11 = vsyncpa [#allocation4], 0
    // Predicated region
    $region2: #{tpu_custom_call.1} parent=1 // pred_check
      _
    $region3: #{tpu_custom_call.1} parent=1 // pred_check_branch
      %13 = sbr.rel (0) target = $region5
    $region4: #{tpu_custom_call.1} parent=1 // pred_region
      _
    $region5: #{tpu_custom_call.1} parent=1 // pred_fallthru
      _
    // Predicated region
    $region6: #{tpu_custom_call.1} parent=1 // pred_check
      _
    $region7: #{tpu_custom_call.1} parent=1 // pred_check_branch
      %15 = sbr.rel (0) target = $region9
    $region8: #{tpu_custom_call.1} parent=1 // pred_region
      _
    $region9: #{tpu_custom_call.1} parent=1 // pred_fallthru
      _
    // Predicated region
    $region10: #{tpu_custom_call.1} parent=1 // pred_check
      _
    $region11: #{tpu_custom_call.1} parent=1 // pred_check_branch
      %17 = sbr.rel (0) target = $region13
    $region12: #{tpu_custom_call.1} parent=1 // pred_region
      _
    $region13: #{tpu_custom_call.1} parent=1 // pred_fallthru
      _
    // Predicated region
    $region14: #{tpu_custom_call.1} parent=1 // pred_check
      _
    $region15: #{tpu_custom_call.1} parent=1 // pred_check_branch
      %19 = sbr.rel (0) target = $region17
    $region16: #{tpu_custom_call.1} parent=1 // pred_region
      _
    $region17: #{tpu_custom_call.1} parent=1 // pred_fallthru
      _
    // Predicated region
    $region18: #{tpu_custom_call.1} parent=1 // pred_check
      _
    $region19: #{tpu_custom_call.1} parent=1 // pred_check_branch
      %21 = sbr.rel (0) target = $region21
    $region20: #{tpu_custom_call.1} parent=1 // pred_region
      _
    $region21: #{tpu_custom_call.1} parent=1 // pred_fallthru
      _
    // Predicated region
    $region22: #{tpu_custom_call.1} parent=1 // pred_check
      _
    $region23: #{tpu_custom_call.1} parent=1 // pred_check_branch
      %23 = sbr.rel (0) target = $region25
    $region24: #{tpu_custom_call.1} parent=1 // pred_region
      _
    $region25: #{tpu_custom_call.1} parent=1 // pred_fallthru
      _
    %v25 = vld [vmem:[%s0] sm:$0xff]
    %v26 = vld [vmem:[%s0 + $0x8] sm:$0xff]
    %v27 = vld [vmem:[%s0 + $0x10] sm:$0xff]
    %v28 = vld [vmem:[%s0 + $0x18] sm:$0xff]
    %v29 = vld [vmem:[%s0 + $0x20] sm:$0xff]
    %v30 = vld [vmem:[%s0 + $0x28] sm:$0xff]
    %v31 = vld [vmem:[%s0 + $0x30] sm:$0xff]
    %v32 = vld [vmem:[%s0 + $0x38] sm:$0xff]
    %v33 = vpack.c.bf16 %v26, %v25
    %v34 = vpack.c.bf16 %v28, %v27
    %v35 = vpack.c.bf16 %v30, %v29
    %v36 = vpack.c.bf16 %v32, %v31
    %v37 = vld [vmem:[%s4] sm:$0xf]
    %v38 = vld [vmem:[%s4 + $0x4] sm:$0xf]
    %v39 = vld [vmem:[%s1] sm:$0xff]
    %v40 = vld [vmem:[%s1 + $0x8] sm:$0xff]
    %v41 = vld [vmem:[%s1 + $0x10] sm:$0xff]
    %v42 = vld [vmem:[%s1 + $0x18] sm:$0xff]
    %v43 = vld [vmem:[%s1 + $0x20] sm:$0xff]
    %v44 = vld [vmem:[%s1 + $0x28] sm:$0xff]
    %v45 = vld [vmem:[%s1 + $0x30] sm:$0xff]
    %v46 = vld [vmem:[%s1 + $0x38] sm:$0xff]
    %v47 = vpack.c.bf16 %v40, %v39
    %v48 = vpack.c.bf16 %v42, %v41
    %v49 = vpack.c.bf16 %v44, %v43
    %v50 = vpack.c.bf16 %v46, %v45
    %v51 = vld [vmem:[%s5] sm:$0xf]
    %vm52 = vcmask 64512
    %v54 = vsel %vm52, %v47, 0
    %v57 = vsel %vm52, %v48, 0
    %v60 = vsel %vm52, %v49, 0
    %v63 = vsel %vm52, %v50, 0
    %vm65 = vcmask 1043456
    %v67 = vsel %vm65, %v51, 0
    %69 = vmatpush.bf16.msra.mxu0 0
    %70 = vmatpush.bf16.msra.mxu0 0
    %71 = vmatpush.bf16.msra.mxu0 0
    %72 = vmatpush.bf16.msra.mxu0 0
    %73 = vmatpush.bf16.msra.mxu0 0
    %74 = vmatpush.bf16.msra.mxu0 0
    %75 = vmatpush.bf16.msra.mxu0 0
    %76 = vmatpush.bf16.msra.mxu0 %v67
    %77 = vmatmul.bf16.gmra.mxu0 %v54
    %v78 = vpop.f32.mrf.mxu0
    %v79 = vadd.f32 0.0, %v78
    %v80 = vpop.f32.mrf.mxu0
    %v81 = vadd.f32 0.0, %v80
    %82 = vmatmul.bf16.gmra.mxu0 %v57
    %v83 = vpop.f32.mrf.mxu0
    %v84 = vadd.f32 0.0, %v83
    %v85 = vpop.f32.mrf.mxu0
    %v86 = vadd.f32 0.0, %v85
    %87 = vmatmul.bf16.gmra.mxu0 %v60
    %v88 = vpop.f32.mrf.mxu0
    %v89 = vadd.f32 0.0, %v88
    %v90 = vpop.f32.mrf.mxu0
    %v91 = vadd.f32 0.0, %v90
    %92 = vmatmul.bf16.gmra.mxu0 %v63
    %v93 = vpop.f32.mrf.mxu0
    %v94 = vadd.f32 0.0, %v93
    %v95 = vpop.f32.mrf.mxu0
    %v96 = vadd.f32 0.0, %v95
    %97 = vdwg.mxu0
    %v100 = vunpack.c.l.b16 %v37
    %v101 = vunpack.c.l.b16 %v38
    %v102 = vpack.c.b16 %v101, %v100
    %vm104 = vcmask 130048
    %v106 = vsel %vm104, %v33, 0
    %v109 = vsel %vm104, %v34, 0
    %v112 = vsel %vm104, %v35, 0
    %v115 = vsel %vm104, %v36, 0
    %117 = vmatpush.bf16.msra.mxu0 0
    %118 = vmatpush.bf16.msra.mxu0 0
    %119 = vmatpush.bf16.msra.mxu0 0
    %120 = vmatpush.bf16.msra.mxu0 0
    %121 = vmatpush.bf16.msra.mxu0 0
    %122 = vmatpush.bf16.msra.mxu0 0
    %123 = vmatpush.bf16.msra.mxu0 0
    %124 = vmatpush.bf16.msra.mxu0 %v102
    %125 = vmatmul.bf16.gmra.mxu0 %v106
    %v126 = vpop.f32.mrf.mxu0
    %v127 = vadd.f32 %v79, %v126
    %v128 = vpop.f32.mrf.mxu0
    %v129 = vadd.f32 %v81, %v128
    %130 = vmatmul.bf16.gmra.mxu0 %v109
    %v131 = vpop.f32.mrf.mxu0
    %v132 = vadd.f32 %v84, %v131
    %v133 = vpop.f32.mrf.mxu0
    %v134 = vadd.f32 %v86, %v133
    %135 = vmatmul.bf16.gmra.mxu0 %v112
    %v136 = vpop.f32.mrf.mxu0
    %v137 = vadd.f32 %v89, %v136
    %v138 = vpop.f32.mrf.mxu0
    %v139 = vadd.f32 %v91, %v138
    %140 = vmatmul.bf16.gmra.mxu0 %v115
    %v141 = vpop.f32.mrf.mxu0
    %v142 = vadd.f32 %v94, %v141
    %v143 = vpop.f32.mrf.mxu0
    %v144 = vadd.f32 %v96, %v143
    %145 = vdwg.mxu0
    %146 = vst [vmem:[#allocation2] sm:$0xff] %v127
    %147 = vst [vmem:[#allocation2 + $0x8] sm:$0xff] %v129
    %148 = vst [vmem:[#allocation2 + $0x10] sm:$0xff] %v132
    %149 = vst [vmem:[#allocation2 + $0x18] sm:$0xff] %v134
    %150 = vst [vmem:[#allocation2 + $0x20] sm:$0xff] %v137
    %151 = vst [vmem:[#allocation2 + $0x28] sm:$0xff] %v139
    %152 = vst [vmem:[#allocation2 + $0x30] sm:$0xff] %v142
    %153 = vst [vmem:[#allocation2 + $0x38] sm:$0xff] %v144
    %v154 = vld [vmem:[%s3] sm:$0xf]
    %v155 = vld [vmem:[%s3 + $0x4] sm:$0xf]
    %v156 = vld [vmem:[%s3 + $0x8] sm:$0xf]
    %v157 = vld [vmem:[%s3 + $0xc] sm:$0xf]
    %v158 = vld [vmem:[%s3 + $0x10] sm:$0xf]
    %v159 = vld [vmem:[%s3 + $0x14] sm:$0xf]
    %v160 = vld [vmem:[%s3 + $0x18] sm:$0xf]
    %v161 = vld [vmem:[%s3 + $0x1c] sm:$0xf]
    %v162 = vld [vmem:[%s3 + $0x20] sm:$0xf]
    %v163 = vld [vmem:[%s3 + $0x24] sm:$0xf]
    %v164 = vld [vmem:[%s3 + $0x28] sm:$0xf]
    %v165 = vld [vmem:[%s3 + $0x2c] sm:$0xf]
    %v166 = vld [vmem:[%s3 + $0x30] sm:$0xf]
    %v167 = vld [vmem:[%s3 + $0x34] sm:$0xf]
    %v168 = vld [vmem:[%s3 + $0x38] sm:$0xf]
    %v169 = vld [vmem:[%s3 + $0x3c] sm:$0xf]
    %v170 = vld [vmem:[%s2] sm:$0xff]
    %v171 = vpack.c.bf16 %v170, %v170
    %v172 = vld [vmem:[#allocation2] sm:$0xff]
    %v189 = vunpack.c.l.b16 %v154
    %v190 = vunpack.c.l.b16 %v155
    %v191 = vunpack.c.l.b16 %v156
    %v192 = vunpack.c.l.b16 %v157
    %v193 = vunpack.c.l.b16 %v158
    %v194 = vunpack.c.l.b16 %v159
    %v195 = vunpack.c.l.b16 %v160
    %v196 = vunpack.c.l.b16 %v161
    %v197 = vunpack.c.l.b16 %v162
    %v198 = vunpack.c.l.b16 %v163
    %v199 = vunpack.c.l.b16 %v164
    %v200 = vunpack.c.l.b16 %v165
    %v201 = vunpack.c.l.b16 %v166
    %v202 = vunpack.c.l.b16 %v167
    %v203 = vunpack.c.l.b16 %v168
    %v204 = vunpack.c.l.b16 %v169
    %v205 = vpack.c.b16 %v190, %v189
    %v206 = vpack.c.b16 %v192, %v191
    %v207 = vpack.c.b16 %v194, %v193
    %v208 = vpack.c.b16 %v196, %v195
    %v209 = vpack.c.b16 %v198, %v197
    %v210 = vpack.c.b16 %v200, %v199
    %v211 = vpack.c.b16 %v202, %v201
    %v212 = vpack.c.b16 %v204, %v203
    %221 = vmatpush.bf16.msra.mxu0 %v212
    %222 = vmatpush.bf16.msra.mxu0 %v211
    %223 = vmatpush.bf16.msra.mxu0 %v210
    %224 = vmatpush.bf16.msra.mxu0 %v209
    %225 = vmatpush.bf16.msra.mxu0 %v208
    %226 = vmatpush.bf16.msra.mxu0 %v207
    %227 = vmatpush.bf16.msra.mxu0 %v206
    %228 = vmatpush.bf16.msra.mxu0 %v205
    %229 = vmatmul.bf16.gmra.mxu0 %v171
    %v230 = vpop.f32.mrf.mxu0
    %v231 = vadd.f32 %v172, %v230
    %v232 = vpop.f32.mrf.mxu0
    %233 = vdwg.mxu0
    %v234 = vtanh.pop %v231
    %235 = vst [vmem:[#allocation3] sm:$0xff] %v234
    %v236 = vpack.c.bf16 %v234, %v234
    %s237 = scalar_lea.vmem [#allocation2], 8
    %v238 = vld [vmem:[%s237] sm:$0xff]
    %239 = vmatpush.bf16.msra.mxu0 %v212
    %240 = vmatpush.bf16.msra.mxu0 %v211
    %241 = vmatpush.bf16.msra.mxu0 %v210
    %242 = vmatpush.bf16.msra.mxu0 %v209
    %243 = vmatpush.bf16.msra.mxu0 %v208
    %244 = vmatpush.bf16.msra.mxu0 %v207
    %245 = vmatpush.bf16.msra.mxu0 %v206
    %246 = vmatpush.bf16.msra.mxu0 %v205
    %247 = vmatmul.bf16.gmra.mxu0 %v236
    %v248 = vpop.f32.mrf.mxu0
    %v249 = vadd.f32 %v238, %v248
    %v250 = vpop.f32.mrf.mxu0
    %251 = vdwg.mxu0
    %v252 = vtanh.pop %v249
    %s253 = scalar_lea.vmem [#allocation3], 8
    %254 = vst [vmem:[%s253] sm:$0xff] %v252
    %v255 = vpack.c.bf16 %v252, %v252
    %s256 = scalar_lea.vmem [#allocation2], 16
    %v257 = vld [vmem:[%s256] sm:$0xff]
    %258 = vmatpush.bf16.msra.mxu0 %v212
    %259 = vmatpush.bf16.msra.mxu0 %v211
    %260 = vmatpush.bf16.msra.mxu0 %v210
    %261 = vmatpush.bf16.msra.mxu0 %v209
    %262 = vmatpush.bf16.msra.mxu0 %v208
    %263 = vmatpush.bf16.msra.mxu0 %v207
    %264 = vmatpush.bf16.msra.mxu0 %v206
    %265 = vmatpush.bf16.msra.mxu0 %v205
    %266 = vmatmul.bf16.gmra.mxu0 %v255
    %v267 = vpop.f32.mrf.mxu0
    %v268 = vadd.f32 %v257, %v267
    %v269 = vpop.f32.mrf.mxu0
    %270 = vdwg.mxu0
    %v271 = vtanh.pop %v268
    %s272 = scalar_lea.vmem [#allocation3], 16
    %273 = vst [vmem:[%s272] sm:$0xff] %v271
    %v274 = vpack.c.bf16 %v271, %v271
    %s275 = scalar_lea.vmem [#allocation2], 24
    %v276 = vld [vmem:[%s275] sm:$0xff]
    %277 = vmatpush.bf16.msra.mxu0 %v212
    %278 = vmatpush.bf16.msra.mxu0 %v211
    %279 = vmatpush.bf16.msra.mxu0 %v210
    %280 = vmatpush.bf16.msra.mxu0 %v209
    %281 = vmatpush.bf16.msra.mxu0 %v208
    %282 = vmatpush.bf16.msra.mxu0 %v207
    %283 = vmatpush.bf16.msra.mxu0 %v206
    %284 = vmatpush.bf16.msra.mxu0 %v205
    %285 = vmatmul.bf16.gmra.mxu0 %v274
    %v286 = vpop.f32.mrf.mxu0
    %v287 = vadd.f32 %v276, %v286
    %v288 = vpop.f32.mrf.mxu0
    %289 = vdwg.mxu0
    %v290 = vtanh.pop %v287
    %s291 = scalar_lea.vmem [#allocation3], 24
    %292 = vst [vmem:[%s291] sm:$0xff] %v290
    %v293 = vpack.c.bf16 %v290, %v290
    %s294 = scalar_lea.vmem [#allocation2], 32
    %v295 = vld [vmem:[%s294] sm:$0xff]
    %296 = vmatpush.bf16.msra.mxu0 %v212
    %297 = vmatpush.bf16.msra.mxu0 %v211
    %298 = vmatpush.bf16.msra.mxu0 %v210
    %299 = vmatpush.bf16.msra.mxu0 %v209
    %300 = vmatpush.bf16.msra.mxu0 %v208
    %301 = vmatpush.bf16.msra.mxu0 %v207
    %302 = vmatpush.bf16.msra.mxu0 %v206
    %303 = vmatpush.bf16.msra.mxu0 %v205
    %304 = vmatmul.bf16.gmra.mxu0 %v293
    %v305 = vpop.f32.mrf.mxu0
    %v306 = vadd.f32 %v295, %v305
    %v307 = vpop.f32.mrf.mxu0
    %308 = vdwg.mxu0
    %v309 = vtanh.pop %v306
    %s310 = scalar_lea.vmem [#allocation3], 32
    %311 = vst [vmem:[%s310] sm:$0xff] %v309
    %v312 = vpack.c.bf16 %v309, %v309
    %s313 = scalar_lea.vmem [#allocation2], 40
    %v314 = vld [vmem:[%s313] sm:$0xff]
    %315 = vmatpush.bf16.msra.mxu0 %v212
    %316 = vmatpush.bf16.msra.mxu0 %v211
    %317 = vmatpush.bf16.msra.mxu0 %v210
    %318 = vmatpush.bf16.msra.mxu0 %v209
    %319 = vmatpush.bf16.msra.mxu0 %v208
    %320 = vmatpush.bf16.msra.mxu0 %v207
    %321 = vmatpush.bf16.msra.mxu0 %v206
    %322 = vmatpush.bf16.msra.mxu0 %v205
    %323 = vmatmul.bf16.gmra.mxu0 %v312
    %v324 = vpop.f32.mrf.mxu0
    %v325 = vadd.f32 %v314, %v324
    %v326 = vpop.f32.mrf.mxu0
    %327 = vdwg.mxu0
    %v328 = vtanh.pop %v325
    %s329 = scalar_lea.vmem [#allocation3], 40
    %330 = vst [vmem:[%s329] sm:$0xff] %v328
    %v331 = vpack.c.bf16 %v328, %v328
    %s332 = scalar_lea.vmem [#allocation2], 48
    %v333 = vld [vmem:[%s332] sm:$0xff]
    %334 = vmatpush.bf16.msra.mxu0 %v212
    %335 = vmatpush.bf16.msra.mxu0 %v211
    %336 = vmatpush.bf16.msra.mxu0 %v210
    %337 = vmatpush.bf16.msra.mxu0 %v209
    %338 = vmatpush.bf16.msra.mxu0 %v208
    %339 = vmatpush.bf16.msra.mxu0 %v207
    %340 = vmatpush.bf16.msra.mxu0 %v206
    %341 = vmatpush.bf16.msra.mxu0 %v205
    %342 = vmatmul.bf16.gmra.mxu0 %v331
    %v343 = vpop.f32.mrf.mxu0
    %v344 = vadd.f32 %v333, %v343
    %v345 = vpop.f32.mrf.mxu0
    %346 = vdwg.mxu0
    %v347 = vtanh.pop %v344
    %s348 = scalar_lea.vmem [#allocation3], 48
    %349 = vst [vmem:[%s348] sm:$0xff] %v347
    %v350 = vpack.c.bf16 %v347, %v347
    %s351 = scalar_lea.vmem [#allocation2], 56
    %v352 = vld [vmem:[%s351] sm:$0xff]
    %353 = vmatpush.bf16.msra.mxu0 %v212
    %354 = vmatpush.bf16.msra.mxu0 %v211
    %355 = vmatpush.bf16.msra.mxu0 %v210
    %356 = vmatpush.bf16.msra.mxu0 %v209
    %357 = vmatpush.bf16.msra.mxu0 %v208
    %358 = vmatpush.bf16.msra.mxu0 %v207
    %359 = vmatpush.bf16.msra.mxu0 %v206
    %360 = vmatpush.bf16.msra.mxu0 %v205
    %361 = vmatmul.bf16.gmra.mxu0 %v350
    %v362 = vpop.f32.mrf.mxu0
    %v363 = vadd.f32 %v352, %v362
    %v364 = vpop.f32.mrf.mxu0
    %365 = vdwg.mxu0
    %v366 = vtanh.pop %v363
    %s367 = scalar_lea.vmem [#allocation3], 56
    %368 = vst [vmem:[%s367] sm:$0xff] %v366
    // Predicated region
    $region26: #{tpu_custom_call.1} parent=1 // pred_check
      _
    $region27: #{tpu_custom_call.1} parent=1 // pred_check_branch
      %370 = sbr.rel (0) target = $region29
    $region28: #{tpu_custom_call.1} parent=1 // pred_region
      %372 = vsyncadd [#allocation4], 0
      %s373 = sshll.u32 [#allocation3], 4
      %s374 = int_to_ptr.vmem [resolvable:$true] %s373
      %s375 = sshll.u32 %s6, 4
      %s376 = int_to_ptr.hbm [resolvable:$true] %s375
      %381 = dma.vmem_to_hbm [thread:$0]  %s374, 1024, %s376, [#allocation4], 128, 128, 8
    $region29: #{tpu_custom_call.1} parent=1 // pred_fallthru
      _
    // Predicated region
    $region30: #{tpu_custom_call.1} parent=1 // pred_check
      _
    $region31: #{tpu_custom_call.1} parent=1 // pred_check_branch
      %383 = sbr.rel (0) target = $region33
    $region32: #{tpu_custom_call.1} parent=1 // pred_region
      %385 = dma.done [#allocation4], 1024
    $region33: #{tpu_custom_call.1} parent=1 // pred_fallthru
      _
    %386 = vsyncpa [#allocation4], 1

</llo_original>
